<compile_context>
chip_gen: v7x
topology: tpu7x:2x2x1
jax: 0.10.0
libtpu: 0.0.40
codegen_flags: <defaults>
</compile_context>

<pallas_src>
import functools
import math

import jax
import jax.numpy as jnp
from jax import lax
from jax.experimental import pallas as pl
from jax.experimental.pallas import tpu as pltpu


def get_bond_feature_dims():
    # OGB bond feature dims (bond type, bond stereo, is_conjugated)
    return [5, 6, 2]


def _round_up(x, m):
    return (x + m - 1) // m * m


def bond_encoder_kernel(idx_ref, hi_ref, lo_ref, out_ref, *,
                        k_slot, n_pack, chunk_ep, n_chunks):
    """One grid step = one tile of packed edge rows.

    idx_ref: (tile_ep, n_pack) int32     combined product-table index per edge
    hi_ref:  (n_pack*k_slot, n_pack*D) bf16   block-diag product table (hi bits)
    lo_ref:  (n_pack*k_slot, n_pack*D) bf16   block-diag product table (lo bits)
    out_ref: (tile_ep, n_pack*D) f32
    """
    def compute(idx):
        rows = idx.shape[0]
        # One 128-lane iota compare per packed edge; lane-concat the per-slot
        # one-hots (128-aligned -> layout only, no cross-lane shuffles).
        cols = lax.broadcasted_iota(jnp.int32, (rows, k_slot), 1)
        parts = [(cols == idx[:, s:s + 1]).astype(jnp.bfloat16)   # exact 0/1
                 for s in range(n_pack)]
        oh = parts[0] if n_pack == 1 else jnp.concatenate(parts, axis=1)
        # Sum-of-gathers == one-hot @ table on the MXU; hi/lo bf16 split keeps
        # ~f32 accuracy with bf16-native MXU passes, accumulated in f32.
        acc = jnp.dot(oh, hi_ref[...], preferred_element_type=jnp.float32)
        return acc + jnp.dot(oh, lo_ref[...], preferred_element_type=jnp.float32)

    if n_chunks == 1:
        out_ref[...] = compute(idx_ref[...])
    else:
        def body(c, carry):
            r0 = pl.multiple_of(c * chunk_ep, 8)
            out_ref[pl.ds(r0, chunk_ep), :] = compute(idx_ref[pl.ds(r0, chunk_ep), :])
            return carry
        lax.fori_loop(0, n_chunks, body, 0)


def make_params(emb_dim, key):
    """Xavier-uniform init for each per-feature embedding table (matches torch)."""
    dims = get_bond_feature_dims()
    tables = []
    for d in dims:
        num_rows = d + 1
        bound = (6.0 / (num_rows + emb_dim)) ** 0.5
        key, sub = jax.random.split(key)
        tables.append(jax.random.uniform(
            sub, (num_rows, emb_dim), jnp.float32, minval=-bound, maxval=bound))
    return tables


def tox_bond_encoder(edge_attr, tables, *, tile_edges=32768, chunk_rows=1024,
                     vmem_block_budget=24 * 1024 * 1024):
    """edge_attr: [E, F] int ; tables: list of [dim_i+1, D] f32 ; returns [E, D] f32."""
    E, F = edge_attr.shape
    assert F == len(tables)
    D = int(tables[0].shape[1])
    sizes = [int(t.shape[0]) for t in tables]
    P = math.prod(sizes)                         # 6*7*3 = 126 joint feature states
    k_slot = _round_up(max(P, 8), 128)           # one-hot width per packed edge

    if E == 0:
        return jnp.zeros((0, D), jnp.float32)

    # Combined product-table index per edge (clamped so out-of-range features
    # cannot silently select another feature's rows).
    x = jnp.clip(edge_attr.astype(jnp.int32), 0,
                 jnp.asarray([s - 1 for s in sizes], jnp.int32))
    idx = x[:, 0]
    for f in range(1, F):
        idx = idx * sizes[f] + x[:, f]

    # Fused product table: prod[(i0*s1+i1)*s2+i2] = t0[i0] + t1[i1] + t2[i2].
    prod = tables[0].astype(jnp.float32)
    for f in range(1, F):
        prod = (prod[:, None, :] + tables[f][None, :, :].astype(jnp.float32)
                ).reshape(-1, D)
    prod = jnp.pad(prod, ((0, k_slot - P), (0, 0)))

    # hi/lo bf16 split: with an exact 0/1 one-hot, oh@hi + oh@lo == prod rows
    # to ~5e-6 absolute, so the f32 reference semantics are preserved.
    hi = prod.astype(jnp.bfloat16)
    lo = (prod - hi.astype(jnp.float32)).astype(jnp.bfloat16)

    # Lane-dense output packing: G edges per packed row so (G*D) % 128 == 0.
    gcd = math.gcd(D, 128)
    G = (128 // gcd) if (D < 128 and gcd >= 16) else 1
    # TODO(synk): emb_dims with gcd(D,128) < 16 (e.g. 300) fall back to G=1
    # (non-lane-dense stores); padding D to a multiple of 128 is an alternative.
    GD, GK = G * D, G * k_slot
    GD_pad = _round_up(GD, 128)

    def block_diag(t):
        if G == 1:
            return t
        out = jnp.zeros((GK, GD), t.dtype)
        for g in range(G):
            out = out.at[g * k_slot:(g + 1) * k_slot, g * D:(g + 1) * D].set(t)
        return out

    hi_t, lo_t = block_diag(hi), block_diag(lo)

    # Pad E only to the packing granule (8*G edges); ragged grid tiles are
    # handled by Pallas boundary masking (no pad-to-full-tile, no big slice).
    granule = 8 * G
    E_pad = _round_up(E, granule)
    if E_pad != E:
        idx = jnp.pad(idx, (0, E_pad - E))       # padded rows select table row 0
    Ep = E_pad // G
    idx_packed = idx.reshape(Ep, G)              # contiguous reshape: free

    # Tile sizing with corrected VMEM accounting: double-buffered blocks, the
    # (tile_ep, G) int32 index block padded to 128 lanes in VMEM, the bf16
    # hi/lo tables (2 pipeline buffers) and the in-kernel one-hot temporaries.
    fixed = 2 * (GK * GD_pad * 2) * 2            # hi+lo tables, double-buffered
    fixed += chunk_rows * GK * 8                 # one-hot + matmul temporaries (approx)
    per_row = (GD_pad * 4 + 128 * 4) * 2         # f32 out + lane-padded i32 idx, x2 bufs
    max_tile_ep = max(8, (vmem_block_budget - fixed) // per_row)

    tile_ep = min(max(8, tile_edges // G), max_tile_ep, Ep)
    tile_ep = max(8, tile_ep - tile_ep % 8)
    chunk_ep = min(chunk_rows, tile_ep)
    tile_ep = tile_ep - tile_ep % chunk_ep       # tile = whole number of chunks
    n_chunks = tile_ep // chunk_ep
    grid = (pl.cdiv(Ep, tile_ep),)

    kernel = functools.partial(bond_encoder_kernel, k_slot=k_slot, n_pack=G,
                               chunk_ep=chunk_ep, n_chunks=n_chunks)

    out_packed = pl.pallas_call(
        kernel,
        out_shape=jax.ShapeDtypeStruct((Ep, GD), jnp.float32),
        grid_spec=pltpu.PrefetchScalarGridSpec(
            num_scalar_prefetch=0,
            grid=grid,
            in_specs=[
                pl.BlockSpec((tile_ep, G), lambda i: (i, 0)),
                pl.BlockSpec((GK, GD), lambda i: (0, 0)),    # constant: no re-DMA
                pl.BlockSpec((GK, GD), lambda i: (0, 0)),
            ],
            out_specs=pl.BlockSpec((tile_ep, GD), lambda i: (i, 0)),
        ),
        compiler_params=pltpu.CompilerParams(
            dimension_semantics=("parallel",),               # megacore sharding
            vmem_limit_bytes=32 * 1024 * 1024),
    )(idx_packed, hi_t, lo_t)

    out = out_packed.reshape(E_pad, D)           # contiguous reshape: free
    if E_pad != E:
        out = out[:E]                            # at most a granule-sized overhang
    return out


def tox_bond_encoder_ref(edge_attr, tables):
    """Pure-JAX reference mirroring the PyTorch forward."""
    out = 0
    for i in range(edge_attr.shape[1]):
        out = out + tables[i][edge_attr[:, i]]
    return out


if __name__ == "__main__":
    key = jax.random.PRNGKey(0)
    emb_dim = 32
    dims = get_bond_feature_dims()
    tables = make_params(emb_dim, key)

    def make_edges(k, n):
        cols = []
        for d in dims:
            k, sub = jax.random.split(k)
            cols.append(jax.random.randint(sub, (n, 1), 0, d + 1, dtype=jnp.int32))
        return jnp.concatenate(cols, axis=1)

    run = jax.jit(tox_bond_encoder)

    # Small case: E=24 is not a multiple of the 8*G packing granule.
    key, k1 = jax.random.split(key)
    edge_attr = make_edges(k1, 24)
    out = jax.block_until_ready(run(edge_attr, tables))
    ref = tox_bond_encoder_ref(edge_attr, tables)
    assert out.shape == (24, emb_dim)
    assert jnp.allclose(out, ref, atol=3e-5, rtol=3e-5)

    # Larger ragged case: exercises the multi-step "parallel" grid, the masked
    # boundary tile, the granule pad + trailing slice, and the in-kernel chunk loop.
    key, k2 = jax.random.split(key)
    edge_attr2 = make_edges(k2, 200001)
    out2 = jax.block_until_ready(run(edge_attr2, tables))
    ref2 = tox_bond_encoder_ref(edge_attr2, tables)
    assert out2.shape == (200001, emb_dim)
    assert jnp.allclose(out2, ref2, atol=3e-5, rtol=3e-5)

    print("KERNEL_OK")
</pallas_src>

<mosaic_0001>
module attributes {stable_mosaic.version = 11 : i64} {
  func.func @bond_encoder_kernel(%arg0: i32, %arg1: memref<8x4xi32, #tpu.memory_space<vmem>>, %arg2: memref<512x128xbf16, #tpu.memory_space<vmem>>, %arg3: memref<512x128xbf16, #tpu.memory_space<vmem>>, %arg4: memref<8x128xf32, #tpu.memory_space<vmem>>) attributes {dimension_semantics = [#tpu.dimension_semantics<parallel>], iteration_bounds = array<i64: 1>, scalar_prefetch = 0 : i64, scratch_operands = 0 : i64, tpu.core_type = #tpu.core_type<tc>, window_params = [{transform_indices = @transform_0, window_bounds = array<i64: 8, 4>}, {pipeline_mode = #tpu.pipeline_mode<synchronous>, transform_indices = @transform_1, window_bounds = array<i64: 512, 128>}, {pipeline_mode = #tpu.pipeline_mode<synchronous>, transform_indices = @transform_2, window_bounds = array<i64: 512, 128>}, {transform_indices = @transform_3, window_bounds = array<i64: 8, 128>}]} {
    %c0 = arith.constant 0 : index
    %c0_0 = arith.constant 0 : index
    %0 = vector.load %arg1[%c0, %c0_0] : memref<8x4xi32, #tpu.memory_space<vmem>>, vector<8x4xi32>
    %1 = tpu.iota {dimensions = array<i32: 1>} : vector<8x128xi32>
    %2 = vector.extract_strided_slice %0 {offsets = [0, 0], sizes = [8, 1], strides = [1, 1]} : vector<8x4xi32> to vector<8x1xi32>
    %3 = vector.broadcast %2 : vector<8x1xi32> to vector<8x128xi32>
    %4 = arith.cmpi eq, %1, %3 : vector<8x128xi32>
    %5 = arith.extui %4 : vector<8x128xi1> to vector<8x128xi32>
    %6 = arith.sitofp %5 : vector<8x128xi32> to vector<8x128xf32>
    %7 = arith.truncf %6 : vector<8x128xf32> to vector<8x128xbf16>
    %8 = vector.extract_strided_slice %0 {offsets = [0, 1], sizes = [8, 1], strides = [1, 1]} : vector<8x4xi32> to vector<8x1xi32>
    %9 = vector.broadcast %8 : vector<8x1xi32> to vector<8x128xi32>
    %10 = arith.cmpi eq, %1, %9 : vector<8x128xi32>
    %11 = arith.extui %10 : vector<8x128xi1> to vector<8x128xi32>
    %12 = arith.sitofp %11 : vector<8x128xi32> to vector<8x128xf32>
    %13 = arith.truncf %12 : vector<8x128xf32> to vector<8x128xbf16>
    %14 = vector.extract_strided_slice %0 {offsets = [0, 2], sizes = [8, 1], strides = [1, 1]} : vector<8x4xi32> to vector<8x1xi32>
    %15 = vector.broadcast %14 : vector<8x1xi32> to vector<8x128xi32>
    %16 = arith.cmpi eq, %1, %15 : vector<8x128xi32>
    %17 = arith.extui %16 : vector<8x128xi1> to vector<8x128xi32>
    %18 = arith.sitofp %17 : vector<8x128xi32> to vector<8x128xf32>
    %19 = arith.truncf %18 : vector<8x128xf32> to vector<8x128xbf16>
    %20 = vector.extract_strided_slice %0 {offsets = [0, 3], sizes = [8, 1], strides = [1, 1]} : vector<8x4xi32> to vector<8x1xi32>
    %21 = vector.broadcast %20 : vector<8x1xi32> to vector<8x128xi32>
    %22 = arith.cmpi eq, %1, %21 : vector<8x128xi32>
    %23 = arith.extui %22 : vector<8x128xi1> to vector<8x128xi32>
    %24 = arith.sitofp %23 : vector<8x128xi32> to vector<8x128xf32>
    %25 = arith.truncf %24 : vector<8x128xf32> to vector<8x128xbf16>
    %26 = tpu.concatenate %7, %13, %19, %25 in 1 : vector<8x128xbf16>, vector<8x128xbf16>, vector<8x128xbf16>, vector<8x128xbf16> -> vector<8x512xbf16>
    %c0_1 = arith.constant 0 : index
    %c0_2 = arith.constant 0 : index
    %27 = vector.load %arg2[%c0_1, %c0_2] : memref<512x128xbf16, #tpu.memory_space<vmem>>, vector<512x128xbf16>
    %cst = arith.constant dense<0.000000e+00> : vector<8x128xf32>
    %28 = tpu.matmul %26, %27, %cst {dimension_numbers = #tpu.dot_dimension_numbers<[1], [0], [0], [1], [0, 0, 1, 1], [], []>} : vector<8x512xbf16>, vector<512x128xbf16>, vector<8x128xf32> -> vector<8x128xf32>
    %c0_3 = arith.constant 0 : index
    %c0_4 = arith.constant 0 : index
    %29 = vector.load %arg3[%c0_3, %c0_4] : memref<512x128xbf16, #tpu.memory_space<vmem>>, vector<512x128xbf16>
    %cst_5 = arith.constant dense<0.000000e+00> : vector<8x128xf32>
    %30 = tpu.matmul %26, %29, %cst_5 {dimension_numbers = #tpu.dot_dimension_numbers<[1], [0], [0], [1], [0, 0, 1, 1], [], []>} : vector<8x512xbf16>, vector<512x128xbf16>, vector<8x128xf32> -> vector<8x128xf32>
    %31 = arith.addf %28, %30 : vector<8x128xf32>
    %c0_6 = arith.constant 0 : index
    %c0_7 = arith.constant 0 : index
    %32 = vector.load %arg4[%c0_6, %c0_7] : memref<8x128xf32, #tpu.memory_space<vmem>>, vector<8x128xf32>
    tpu.vector_store %arg4[%c0_6, %c0_7], %31 {strides = array<i32>} : memref<8x128xf32, #tpu.memory_space<vmem>>, vector<8x128xf32>,
    return
  }
  func.func @transform_0(%arg0: i32) -> (i32, i32) {
    %c0_i32 = arith.constant 0 : i32
    %c0_i32_0 = arith.constant 0 : i32
    return %arg0, %c0_i32 : i32, i32
  }
  func.func @transform_1(%arg0: i32) -> (i32, i32) {
    %c0_i32 = arith.constant 0 : i32
    %c0_i32_0 = arith.constant 0 : i32
    %c0_i32_1 = arith.constant 0 : i32
    return %c0_i32, %c0_i32_0 : i32, i32
  }
  func.func @transform_2(%arg0: i32) -> (i32, i32) {
    %c0_i32 = arith.constant 0 : i32
    %c0_i32_0 = arith.constant 0 : i32
    %c0_i32_1 = arith.constant 0 : i32
    return %c0_i32, %c0_i32_0 : i32, i32
  }
  func.func @transform_3(%arg0: i32) -> (i32, i32) {
    %c0_i32 = arith.constant 0 : i32
    %c0_i32_0 = arith.constant 0 : i32
    return %arg0, %c0_i32 : i32, i32
  }
}

</mosaic_0001>

<llo_original>
// kernel: tox_bond_encoder.1
$region0: #{tox_bond_encoder.1}
  #allocation0 [shape = 'u32[]', space=smem, size = 0x4, offset = 0x4, fixed_abs, tag = 'smem constant byte address 0x4 - core index']
  #allocation1 [shape = 'u32[144,128]{1,0:T(1,128)}', space=vmem, size = 0x12000, scoped, tag = 'internal scratch']
  %s0 = inlined_call_operand.vmem [shape: s32[8,4], index: 0, kind: input, shape index: {}]
  %s1 = inlined_call_operand.vmem [shape: bf16[512,128], index: 1, kind: input, shape index: {}]
  %s2 = inlined_call_operand.vmem [shape: bf16[512,128], index: 2, kind: input, shape index: {}]
  %s3 = inlined_call_operand.vmem [shape: f32[8,128], index: 3, kind: output, shape index: {}]
  %s4 = sld [smem:[#allocation0]]
  $region22: #{tox_bond_encoder.1} parent=0
    _
  %s6 = ssub.s32 1, %s4
  %s7 = scalar_select 0, %s6, %s4
  // Predicated region
  $region2: #{tox_bond_encoder.1} parent=0 // pred_check
    _
  $region3: #{tox_bond_encoder.1} parent=0 // pred_check_branch
    %9 = sbr.rel (0) target = $region5
  $region4: #{tox_bond_encoder.1} parent=0 // pred_region
    _
  $region5: #{tox_bond_encoder.1} parent=0 // pred_fallthru
    _
  // Predicated region
  $region6: #{tox_bond_encoder.1} parent=0 // pred_check
    _
  $region7: #{tox_bond_encoder.1} parent=0 // pred_check_branch
    %11 = sbr.rel (0) target = $region9
  $region8: #{tox_bond_encoder.1} parent=0 // pred_region
    _
  $region9: #{tox_bond_encoder.1} parent=0 // pred_fallthru
    _
  // Predicated region
  $region10: #{tox_bond_encoder.1} parent=0 // pred_check
    _
  $region11: #{tox_bond_encoder.1} parent=0 // pred_check_branch
    %13 = sbr.rel (0) target = $region13
  $region12: #{tox_bond_encoder.1} parent=0 // pred_region
    _
  $region13: #{tox_bond_encoder.1} parent=0 // pred_fallthru
    _
  %v15 = vld [vmem:[%s0] sm:$0xff]
  %v16 = vlaneseq
  %v17 = vand.u32 %v16, 127
  %18 = vset.pattern.permute.xlu0 0
  %19 = vperm.xlu0 %18, %v15
  %v20 = vpop.permute.xlu0 %19
  %vm21 = vcmp.eq.s32.totalorder %v17, %v20
  %v22 = vsel %vm21, 1, 0
  %v23 = vcvt.s32.f32 %v22
  %v24 = vpack.c.bf16 %v23, %v23
  %25 = vset.pattern.permute.xlu0 1
  %26 = vperm.xlu0 %25, %v15
  %v27 = vpop.permute.xlu0 %26
  %vm28 = vcmp.eq.s32.totalorder %v17, %v27
  %v29 = vsel %vm28, 1, 0
  %v30 = vcvt.s32.f32 %v29
  %v31 = vpack.c.bf16 %v30, %v30
  %32 = vset.pattern.permute.xlu0 2
  %33 = vperm.xlu0 %32, %v15
  %v34 = vpop.permute.xlu0 %33
  %vm35 = vcmp.eq.s32.totalorder %v17, %v34
  %v36 = vsel %vm35, 1, 0
  %v37 = vcvt.s32.f32 %v36
  %v38 = vpack.c.bf16 %v37, %v37
  %39 = vset.pattern.permute.xlu0 3
  %40 = vperm.xlu0 %39, %v15
  %v41 = vpop.permute.xlu0 %40
  %vm42 = vcmp.eq.s32.totalorder %v17, %v41
  %v43 = vsel %vm42, 1, 0
  %v44 = vcvt.s32.f32 %v43
  %v45 = vpack.c.bf16 %v44, %v44
  %v46 = vld [vmem:[%s1] sm:$0xf]
  %v47 = vld [vmem:[%s1 + $0x4] sm:$0xf]
  %v48 = vld [vmem:[%s1 + $0x8] sm:$0xf]
  %v49 = vld [vmem:[%s1 + $0xc] sm:$0xf]
  %v50 = vld [vmem:[%s1 + $0x10] sm:$0xf]
  %v51 = vld [vmem:[%s1 + $0x14] sm:$0xf]
  %v52 = vld [vmem:[%s1 + $0x18] sm:$0xf]
  %v53 = vld [vmem:[%s1 + $0x1c] sm:$0xf]
  %v54 = vld [vmem:[%s1 + $0x20] sm:$0xf]
  %v55 = vld [vmem:[%s1 + $0x24] sm:$0xf]
  %v56 = vld [vmem:[%s1 + $0x28] sm:$0xf]
  %v57 = vld [vmem:[%s1 + $0x2c] sm:$0xf]
  %v58 = vld [vmem:[%s1 + $0x30] sm:$0xf]
  %v59 = vld [vmem:[%s1 + $0x34] sm:$0xf]
  %v60 = vld [vmem:[%s1 + $0x38] sm:$0xf]
  %v61 = vld [vmem:[%s1 + $0x3c] sm:$0xf]
  %v62 = vld [vmem:[%s1 + $0x40] sm:$0xf]
  %v63 = vld [vmem:[%s1 + $0x44] sm:$0xf]
  %v64 = vld [vmem:[%s1 + $0x48] sm:$0xf]
  %v65 = vld [vmem:[%s1 + $0x4c] sm:$0xf]
  %v66 = vld [vmem:[%s1 + $0x50] sm:$0xf]
  %v67 = vld [vmem:[%s1 + $0x54] sm:$0xf]
  %v68 = vld [vmem:[%s1 + $0x58] sm:$0xf]
  %v69 = vld [vmem:[%s1 + $0x5c] sm:$0xf]
  %v70 = vld [vmem:[%s1 + $0x60] sm:$0xf]
  %v71 = vld [vmem:[%s1 + $0x64] sm:$0xf]
  %v72 = vld [vmem:[%s1 + $0x68] sm:$0xf]
  %v73 = vld [vmem:[%s1 + $0x6c] sm:$0xf]
  %v74 = vld [vmem:[%s1 + $0x70] sm:$0xf]
  %v75 = vld [vmem:[%s1 + $0x74] sm:$0xf]
  %v76 = vld [vmem:[%s1 + $0x78] sm:$0xf]
  %v77 = vld [vmem:[%s1 + $0x7c] sm:$0xf]
  %v78 = vld [vmem:[%s1 + $0x80] sm:$0xf]
  %v79 = vld [vmem:[%s1 + $0x84] sm:$0xf]
  %v80 = vld [vmem:[%s1 + $0x88] sm:$0xf]
  %v81 = vld [vmem:[%s1 + $0x8c] sm:$0xf]
  %v82 = vld [vmem:[%s1 + $0x90] sm:$0xf]
  %v83 = vld [vmem:[%s1 + $0x94] sm:$0xf]
  %v84 = vld [vmem:[%s1 + $0x98] sm:$0xf]
  %v85 = vld [vmem:[%s1 + $0x9c] sm:$0xf]
  %v86 = vld [vmem:[%s1 + $0xa0] sm:$0xf]
  %v87 = vld [vmem:[%s1 + $0xa4] sm:$0xf]
  %v88 = vld [vmem:[%s1 + $0xa8] sm:$0xf]
  %v89 = vld [vmem:[%s1 + $0xac] sm:$0xf]
  %v90 = vld [vmem:[%s1 + $0xb0] sm:$0xf]
  %v91 = vld [vmem:[%s1 + $0xb4] sm:$0xf]
  %v92 = vld [vmem:[%s1 + $0xb8] sm:$0xf]
  %v93 = vld [vmem:[%s1 + $0xbc] sm:$0xf]
  %v94 = vld [vmem:[%s1 + $0xc0] sm:$0xf]
  %v95 = vld [vmem:[%s1 + $0xc4] sm:$0xf]
  %v96 = vld [vmem:[%s1 + $0xc8] sm:$0xf]
  %v97 = vld [vmem:[%s1 + $0xcc] sm:$0xf]
  %v98 = vld [vmem:[%s1 + $0xd0] sm:$0xf]
  %v99 = vld [vmem:[%s1 + $0xd4] sm:$0xf]
  %v100 = vld [vmem:[%s1 + $0xd8] sm:$0xf]
  %v101 = vld [vmem:[%s1 + $0xdc] sm:$0xf]
  %v102 = vld [vmem:[%s1 + $0xe0] sm:$0xf]
  %v103 = vld [vmem:[%s1 + $0xe4] sm:$0xf]
  %v104 = vld [vmem:[%s1 + $0xe8] sm:$0xf]
  %v105 = vld [vmem:[%s1 + $0xec] sm:$0xf]
  %v106 = vld [vmem:[%s1 + $0xf0] sm:$0xf]
  %v107 = vld [vmem:[%s1 + $0xf4] sm:$0xf]
  %v108 = vld [vmem:[%s1 + $0xf8] sm:$0xf]
  %v109 = vld [vmem:[%s1 + $0xfc] sm:$0xf]
  %v110 = vld [vmem:[%s2] sm:$0xf]
  %v111 = vld [vmem:[%s2 + $0x4] sm:$0xf]
  %v112 = vld [vmem:[%s2 + $0x8] sm:$0xf]
  %v113 = vld [vmem:[%s2 + $0xc] sm:$0xf]
  %v114 = vld [vmem:[%s2 + $0x10] sm:$0xf]
  %v115 = vld [vmem:[%s2 + $0x14] sm:$0xf]
  %v116 = vld [vmem:[%s2 + $0x18] sm:$0xf]
  %v117 = vld [vmem:[%s2 + $0x1c] sm:$0xf]
  %v118 = vld [vmem:[%s2 + $0x20] sm:$0xf]
  %v119 = vld [vmem:[%s2 + $0x24] sm:$0xf]
  %v120 = vld [vmem:[%s2 + $0x28] sm:$0xf]
  %v121 = vld [vmem:[%s2 + $0x2c] sm:$0xf]
  %v122 = vld [vmem:[%s2 + $0x30] sm:$0xf]
  %v123 = vld [vmem:[%s2 + $0x34] sm:$0xf]
  %v124 = vld [vmem:[%s2 + $0x38] sm:$0xf]
  %v125 = vld [vmem:[%s2 + $0x3c] sm:$0xf]
  %v126 = vld [vmem:[%s2 + $0x40] sm:$0xf]
  %v127 = vld [vmem:[%s2 + $0x44] sm:$0xf]
  %v128 = vld [vmem:[%s2 + $0x48] sm:$0xf]
  %v129 = vld [vmem:[%s2 + $0x4c] sm:$0xf]
  %v130 = vld [vmem:[%s2 + $0x50] sm:$0xf]
  %v131 = vld [vmem:[%s2 + $0x54] sm:$0xf]
  %v132 = vld [vmem:[%s2 + $0x58] sm:$0xf]
  %v133 = vld [vmem:[%s2 + $0x5c] sm:$0xf]
  %v134 = vld [vmem:[%s2 + $0x60] sm:$0xf]
  %v135 = vld [vmem:[%s2 + $0x64] sm:$0xf]
  %v136 = vld [vmem:[%s2 + $0x68] sm:$0xf]
  %v137 = vld [vmem:[%s2 + $0x6c] sm:$0xf]
  %v138 = vld [vmem:[%s2 + $0x70] sm:$0xf]
  %v139 = vld [vmem:[%s2 + $0x74] sm:$0xf]
  %v140 = vld [vmem:[%s2 + $0x78] sm:$0xf]
  %v141 = vld [vmem:[%s2 + $0x7c] sm:$0xf]
  %v142 = vld [vmem:[%s2 + $0x80] sm:$0xf]
  %v143 = vld [vmem:[%s2 + $0x84] sm:$0xf]
  %v144 = vld [vmem:[%s2 + $0x88] sm:$0xf]
  %v145 = vld [vmem:[%s2 + $0x8c] sm:$0xf]
  %v146 = vld [vmem:[%s2 + $0x90] sm:$0xf]
  %v147 = vld [vmem:[%s2 + $0x94] sm:$0xf]
  %v148 = vld [vmem:[%s2 + $0x98] sm:$0xf]
  %v149 = vld [vmem:[%s2 + $0x9c] sm:$0xf]
  %v150 = vld [vmem:[%s2 + $0xa0] sm:$0xf]
  %v151 = vld [vmem:[%s2 + $0xa4] sm:$0xf]
  %v152 = vld [vmem:[%s2 + $0xa8] sm:$0xf]
  %v153 = vld [vmem:[%s2 + $0xac] sm:$0xf]
  %v154 = vld [vmem:[%s2 + $0xb0] sm:$0xf]
  %v155 = vld [vmem:[%s2 + $0xb4] sm:$0xf]
  %v156 = vld [vmem:[%s2 + $0xb8] sm:$0xf]
  %v157 = vld [vmem:[%s2 + $0xbc] sm:$0xf]
  %v158 = vld [vmem:[%s2 + $0xc0] sm:$0xf]
  %v159 = vld [vmem:[%s2 + $0xc4] sm:$0xf]
  %v160 = vld [vmem:[%s2 + $0xc8] sm:$0xf]
  %v161 = vld [vmem:[%s2 + $0xcc] sm:$0xf]
  %v162 = vld [vmem:[%s2 + $0xd0] sm:$0xf]
  %v163 = vld [vmem:[%s2 + $0xd4] sm:$0xf]
  %v164 = vld [vmem:[%s2 + $0xd8] sm:$0xf]
  %v165 = vld [vmem:[%s2 + $0xdc] sm:$0xf]
  %v166 = vld [vmem:[%s2 + $0xe0] sm:$0xf]
  %v167 = vld [vmem:[%s2 + $0xe4] sm:$0xf]
  %v168 = vld [vmem:[%s2 + $0xe8] sm:$0xf]
  %v169 = vld [vmem:[%s2 + $0xec] sm:$0xf]
  %v170 = vld [vmem:[%s2 + $0xf0] sm:$0xf]
  %v171 = vld [vmem:[%s2 + $0xf4] sm:$0xf]
  %v172 = vld [vmem:[%s2 + $0xf8] sm:$0xf]
  %v173 = vld [vmem:[%s2 + $0xfc] sm:$0xf]
  %v238 = vunpack.c.l.b16 %v110
  %v239 = vunpack.c.l.b16 %v111
  %v240 = vunpack.c.l.b16 %v112
  %v241 = vunpack.c.l.b16 %v113
  %v242 = vunpack.c.l.b16 %v114
  %v243 = vunpack.c.l.b16 %v115
  %v244 = vunpack.c.l.b16 %v116
  %v245 = vunpack.c.l.b16 %v117
  %v246 = vunpack.c.l.b16 %v118
  %v247 = vunpack.c.l.b16 %v119
  %v248 = vunpack.c.l.b16 %v120
  %v249 = vunpack.c.l.b16 %v121
  %v250 = vunpack.c.l.b16 %v122
  %v251 = vunpack.c.l.b16 %v123
  %v252 = vunpack.c.l.b16 %v124
  %v253 = vunpack.c.l.b16 %v125
  %v254 = vunpack.c.l.b16 %v126
  %v255 = vunpack.c.l.b16 %v127
  %v256 = vunpack.c.l.b16 %v128
  %v257 = vunpack.c.l.b16 %v129
  %v258 = vunpack.c.l.b16 %v130
  %v259 = vunpack.c.l.b16 %v131
  %v260 = vunpack.c.l.b16 %v132
  %v261 = vunpack.c.l.b16 %v133
  %v262 = vunpack.c.l.b16 %v134
  %v263 = vunpack.c.l.b16 %v135
  %v264 = vunpack.c.l.b16 %v136
  %v265 = vunpack.c.l.b16 %v137
  %v266 = vunpack.c.l.b16 %v138
  %v267 = vunpack.c.l.b16 %v139
  %v268 = vunpack.c.l.b16 %v140
  %v269 = vunpack.c.l.b16 %v141
  %v270 = vunpack.c.l.b16 %v142
  %v271 = vunpack.c.l.b16 %v143
  %v272 = vunpack.c.l.b16 %v144
  %v273 = vunpack.c.l.b16 %v145
  %v274 = vunpack.c.l.b16 %v146
  %v275 = vunpack.c.l.b16 %v147
  %v276 = vunpack.c.l.b16 %v148
  %v277 = vunpack.c.l.b16 %v149
  %v278 = vunpack.c.l.b16 %v150
  %v279 = vunpack.c.l.b16 %v151
  %v280 = vunpack.c.l.b16 %v152
  %v281 = vunpack.c.l.b16 %v153
  %v282 = vunpack.c.l.b16 %v154
  %v283 = vunpack.c.l.b16 %v155
  %v284 = vunpack.c.l.b16 %v156
  %v285 = vunpack.c.l.b16 %v157
  %v286 = vunpack.c.l.b16 %v158
  %v287 = vunpack.c.l.b16 %v159
  %v288 = vunpack.c.l.b16 %v160
  %v289 = vunpack.c.l.b16 %v161
  %v290 = vunpack.c.l.b16 %v162
  %v291 = vunpack.c.l.b16 %v163
  %v292 = vunpack.c.l.b16 %v164
  %v293 = vunpack.c.l.b16 %v165
  %v294 = vunpack.c.l.b16 %v166
  %v295 = vunpack.c.l.b16 %v167
  %v296 = vunpack.c.l.b16 %v168
  %v297 = vunpack.c.l.b16 %v169
  %v298 = vunpack.c.l.b16 %v170
  %v299 = vunpack.c.l.b16 %v171
  %v300 = vunpack.c.l.b16 %v172
  %v301 = vunpack.c.l.b16 %v173
  %v302 = vpack.c.b16 %v239, %v238
  %v303 = vpack.c.b16 %v241, %v240
  %v304 = vpack.c.b16 %v243, %v242
  %v305 = vpack.c.b16 %v245, %v244
  %v306 = vpack.c.b16 %v247, %v246
  %v307 = vpack.c.b16 %v249, %v248
  %v308 = vpack.c.b16 %v251, %v250
  %v309 = vpack.c.b16 %v253, %v252
  %v310 = vpack.c.b16 %v255, %v254
  %v311 = vpack.c.b16 %v257, %v256
  %v312 = vpack.c.b16 %v259, %v258
  %v313 = vpack.c.b16 %v261, %v260
  %v314 = vpack.c.b16 %v263, %v262
  %v315 = vpack.c.b16 %v265, %v264
  %v316 = vpack.c.b16 %v267, %v266
  %v317 = vpack.c.b16 %v269, %v268
  %v318 = vpack.c.b16 %v271, %v270
  %v319 = vpack.c.b16 %v273, %v272
  %v320 = vpack.c.b16 %v275, %v274
  %v321 = vpack.c.b16 %v277, %v276
  %v322 = vpack.c.b16 %v279, %v278
  %v323 = vpack.c.b16 %v281, %v280
  %v324 = vpack.c.b16 %v283, %v282
  %v325 = vpack.c.b16 %v285, %v284
  %v326 = vpack.c.b16 %v287, %v286
  %v327 = vpack.c.b16 %v289, %v288
  %v328 = vpack.c.b16 %v291, %v290
  %v329 = vpack.c.b16 %v293, %v292
  %v330 = vpack.c.b16 %v295, %v294
  %v331 = vpack.c.b16 %v297, %v296
  %v332 = vpack.c.b16 %v299, %v298
  %v333 = vpack.c.b16 %v301, %v300
  %366 = vmatprep.subr.bf16.mxu0 0
  %367 = vmatpush1.bf16.msra.mxu0 %v302
  %368 = vmatprep.subr.bf16.mxu0 0
  %369 = vmatpush1.bf16.msra.mxu0 %v303
  %370 = vmatprep.subr.bf16.mxu0 0
  %371 = vmatpush1.bf16.msra.mxu0 %v304
  %372 = vmatprep.subr.bf16.mxu0 0
  %373 = vmatpush1.bf16.msra.mxu0 %v305
  %374 = vmatprep.subr.bf16.mxu0 0
  %375 = vmatpush1.bf16.msra.mxu0 %v306
  %376 = vmatprep.subr.bf16.mxu0 0
  %377 = vmatpush1.bf16.msra.mxu0 %v307
  %378 = vmatprep.subr.bf16.mxu0 0
  %379 = vmatpush1.bf16.msra.mxu0 %v308
  %380 = vmatprep.subr.bf16.mxu0 0
  %381 = vmatpush1.bf16.msra.mxu0 %v309
  %382 = vmatprep.subr.bf16.mxu0 0
  %383 = vmatpush1.bf16.msra.mxu0 %v310
  %384 = vmatprep.subr.bf16.mxu0 0
  %385 = vmatpush1.bf16.msra.mxu0 %v311
  %386 = vmatprep.subr.bf16.mxu0 0
  %387 = vmatpush1.bf16.msra.mxu0 %v312
  %388 = vmatprep.subr.bf16.mxu0 0
  %389 = vmatpush1.bf16.msra.mxu0 %v313
  %390 = vmatprep.subr.bf16.mxu0 0
  %391 = vmatpush1.bf16.msra.mxu0 %v314
  %392 = vmatprep.subr.bf16.mxu0 0
  %393 = vmatpush1.bf16.msra.mxu0 %v315
  %394 = vmatprep.subr.bf16.mxu0 0
  %395 = vmatpush1.bf16.msra.mxu0 %v316
  %396 = vmatprep.subr.bf16.mxu0 0
  %397 = vmatpush1.bf16.msra.mxu0 %v317
  %398 = vmatprep.mubr.bf16.mxu0 %v31
  %399 = vmatmul.mubr.bf16.gmra.mrb[0].mxu0 %v24
  %v400 = vpop.f32.mrb[0].mxu0
  %v401 = vadd.f32 0.0, %v400
  %v402 = vpop.f32.mrb[0].mxu0
  %v403 = vpop.f32.mrb[0].mxu0
  %v404 = vpop.f32.mrb[0].mxu0
  %405 = vdwg.mxu0
  %406 = vmatprep.subr.bf16.mxu0 0
  %407 = vmatpush1.bf16.msra.mxu0 %v318
  %408 = vmatprep.subr.bf16.mxu0 0
  %409 = vmatpush1.bf16.msra.mxu0 %v319
  %410 = vmatprep.subr.bf16.mxu0 0
  %411 = vmatpush1.bf16.msra.mxu0 %v320
  %412 = vmatprep.subr.bf16.mxu0 0
  %413 = vmatpush1.bf16.msra.mxu0 %v321
  %414 = vmatprep.subr.bf16.mxu0 0
  %415 = vmatpush1.bf16.msra.mxu0 %v322
  %416 = vmatprep.subr.bf16.mxu0 0
  %417 = vmatpush1.bf16.msra.mxu0 %v323
  %418 = vmatprep.subr.bf16.mxu0 0
  %419 = vmatpush1.bf16.msra.mxu0 %v324
  %420 = vmatprep.subr.bf16.mxu0 0
  %421 = vmatpush1.bf16.msra.mxu0 %v325
  %422 = vmatprep.subr.bf16.mxu0 0
  %423 = vmatpush1.bf16.msra.mxu0 %v326
  %424 = vmatprep.subr.bf16.mxu0 0
  %425 = vmatpush1.bf16.msra.mxu0 %v327
  %426 = vmatprep.subr.bf16.mxu0 0
  %427 = vmatpush1.bf16.msra.mxu0 %v328
  %428 = vmatprep.subr.bf16.mxu0 0
  %429 = vmatpush1.bf16.msra.mxu0 %v329
  %430 = vmatprep.subr.bf16.mxu0 0
  %431 = vmatpush1.bf16.msra.mxu0 %v330
  %432 = vmatprep.subr.bf16.mxu0 0
  %433 = vmatpush1.bf16.msra.mxu0 %v331
  %434 = vmatprep.subr.bf16.mxu0 0
  %435 = vmatpush1.bf16.msra.mxu0 %v332
  %436 = vmatprep.subr.bf16.mxu0 0
  %437 = vmatpush1.bf16.msra.mxu0 %v333
  %438 = vmatprep.mubr.bf16.mxu0 %v45
  %439 = vmatmul.mubr.bf16.gmra.mrb[0].mxu0 %v38
  %v440 = vpop.f32.mrb[0].mxu0
  %v441 = vadd.f32 %v401, %v440
  %v442 = vpop.f32.mrb[0].mxu0
  %v443 = vpop.f32.mrb[0].mxu0
  %v444 = vpop.f32.mrb[0].mxu0
  %445 = vdwg.mxu0
  %v510 = vunpack.c.l.b16 %v46
  %v511 = vunpack.c.l.b16 %v47
  %v512 = vunpack.c.l.b16 %v48
  %v513 = vunpack.c.l.b16 %v49
  %v514 = vunpack.c.l.b16 %v50
  %v515 = vunpack.c.l.b16 %v51
  %v516 = vunpack.c.l.b16 %v52
  %v517 = vunpack.c.l.b16 %v53
  %v518 = vunpack.c.l.b16 %v54
  %v519 = vunpack.c.l.b16 %v55
  %v520 = vunpack.c.l.b16 %v56
  %v521 = vunpack.c.l.b16 %v57
  %v522 = vunpack.c.l.b16 %v58
  %v523 = vunpack.c.l.b16 %v59
  %v524 = vunpack.c.l.b16 %v60
  %v525 = vunpack.c.l.b16 %v61
  %v526 = vunpack.c.l.b16 %v62
  %v527 = vunpack.c.l.b16 %v63
  %v528 = vunpack.c.l.b16 %v64
  %v529 = vunpack.c.l.b16 %v65
  %v530 = vunpack.c.l.b16 %v66
  %v531 = vunpack.c.l.b16 %v67
  %v532 = vunpack.c.l.b16 %v68
  %v533 = vunpack.c.l.b16 %v69
  %v534 = vunpack.c.l.b16 %v70
  %v535 = vunpack.c.l.b16 %v71
  %v536 = vunpack.c.l.b16 %v72
  %v537 = vunpack.c.l.b16 %v73
  %v538 = vunpack.c.l.b16 %v74
  %v539 = vunpack.c.l.b16 %v75
  %v540 = vunpack.c.l.b16 %v76
  %v541 = vunpack.c.l.b16 %v77
  %v542 = vunpack.c.l.b16 %v78
  %v543 = vunpack.c.l.b16 %v79
  %v544 = vunpack.c.l.b16 %v80
  %v545 = vunpack.c.l.b16 %v81
  %v546 = vunpack.c.l.b16 %v82
  %v547 = vunpack.c.l.b16 %v83
  %v548 = vunpack.c.l.b16 %v84
  %v549 = vunpack.c.l.b16 %v85
  %v550 = vunpack.c.l.b16 %v86
  %v551 = vunpack.c.l.b16 %v87
  %v552 = vunpack.c.l.b16 %v88
  %v553 = vunpack.c.l.b16 %v89
  %v554 = vunpack.c.l.b16 %v90
  %v555 = vunpack.c.l.b16 %v91
  %v556 = vunpack.c.l.b16 %v92
  %v557 = vunpack.c.l.b16 %v93
  %v558 = vunpack.c.l.b16 %v94
  %v559 = vunpack.c.l.b16 %v95
  %v560 = vunpack.c.l.b16 %v96
  %v561 = vunpack.c.l.b16 %v97
  %v562 = vunpack.c.l.b16 %v98
  %v563 = vunpack.c.l.b16 %v99
  %v564 = vunpack.c.l.b16 %v100
  %v565 = vunpack.c.l.b16 %v101
  %v566 = vunpack.c.l.b16 %v102
  %v567 = vunpack.c.l.b16 %v103
  %v568 = vunpack.c.l.b16 %v104
  %v569 = vunpack.c.l.b16 %v105
  %v570 = vunpack.c.l.b16 %v106
  %v571 = vunpack.c.l.b16 %v107
  %v572 = vunpack.c.l.b16 %v108
  %v573 = vunpack.c.l.b16 %v109
  %v574 = vpack.c.b16 %v511, %v510
  %v575 = vpack.c.b16 %v513, %v512
  %v576 = vpack.c.b16 %v515, %v514
  %v577 = vpack.c.b16 %v517, %v516
  %v578 = vpack.c.b16 %v519, %v518
  %v579 = vpack.c.b16 %v521, %v520
  %v580 = vpack.c.b16 %v523, %v522
  %v581 = vpack.c.b16 %v525, %v524
  %v582 = vpack.c.b16 %v527, %v526
  %v583 = vpack.c.b16 %v529, %v528
  %v584 = vpack.c.b16 %v531, %v530
  %v585 = vpack.c.b16 %v533, %v532
  %v586 = vpack.c.b16 %v535, %v534
  %v587 = vpack.c.b16 %v537, %v536
  %v588 = vpack.c.b16 %v539, %v538
  %v589 = vpack.c.b16 %v541, %v540
  %v590 = vpack.c.b16 %v543, %v542
  %v591 = vpack.c.b16 %v545, %v544
  %v592 = vpack.c.b16 %v547, %v546
  %v593 = vpack.c.b16 %v549, %v548
  %v594 = vpack.c.b16 %v551, %v550
  %v595 = vpack.c.b16 %v553, %v552
  %v596 = vpack.c.b16 %v555, %v554
  %v597 = vpack.c.b16 %v557, %v556
  %v598 = vpack.c.b16 %v559, %v558
  %v599 = vpack.c.b16 %v561, %v560
  %v600 = vpack.c.b16 %v563, %v562
  %v601 = vpack.c.b16 %v565, %v564
  %v602 = vpack.c.b16 %v567, %v566
  %v603 = vpack.c.b16 %v569, %v568
  %v604 = vpack.c.b16 %v571, %v570
  %v605 = vpack.c.b16 %v573, %v572
  %638 = vmatprep.subr.bf16.mxu0 0
  %639 = vmatpush1.bf16.msra.mxu0 %v574
  %640 = vmatprep.subr.bf16.mxu0 0
  %641 = vmatpush1.bf16.msra.mxu0 %v575
  %642 = vmatprep.subr.bf16.mxu0 0
  %643 = vmatpush1.bf16.msra.mxu0 %v576
  %644 = vmatprep.subr.bf16.mxu0 0
  %645 = vmatpush1.bf16.msra.mxu0 %v577
  %646 = vmatprep.subr.bf16.mxu0 0
  %647 = vmatpush1.bf16.msra.mxu0 %v578
  %648 = vmatprep.subr.bf16.mxu0 0
  %649 = vmatpush1.bf16.msra.mxu0 %v579
  %650 = vmatprep.subr.bf16.mxu0 0
  %651 = vmatpush1.bf16.msra.mxu0 %v580
  %652 = vmatprep.subr.bf16.mxu0 0
  %653 = vmatpush1.bf16.msra.mxu0 %v581
  %654 = vmatprep.subr.bf16.mxu0 0
  %655 = vmatpush1.bf16.msra.mxu0 %v582
  %656 = vmatprep.subr.bf16.mxu0 0
  %657 = vmatpush1.bf16.msra.mxu0 %v583
  %658 = vmatprep.subr.bf16.mxu0 0
  %659 = vmatpush1.bf16.msra.mxu0 %v584
  %660 = vmatprep.subr.bf16.mxu0 0
  %661 = vmatpush1.bf16.msra.mxu0 %v585
  %662 = vmatprep.subr.bf16.mxu0 0
  %663 = vmatpush1.bf16.msra.mxu0 %v586
  %664 = vmatprep.subr.bf16.mxu0 0
  %665 = vmatpush1.bf16.msra.mxu0 %v587
  %666 = vmatprep.subr.bf16.mxu0 0
  %667 = vmatpush1.bf16.msra.mxu0 %v588
  %668 = vmatprep.subr.bf16.mxu0 0
  %669 = vmatpush1.bf16.msra.mxu0 %v589
  %670 = vmatprep.mubr.bf16.mxu0 %v31
  %671 = vmatmul.mubr.bf16.gmra.mrb[0].mxu0 %v24
  %v672 = vpop.f32.mrb[0].mxu0
  %v673 = vadd.f32 %v441, %v672
  %v674 = vpop.f32.mrb[0].mxu0
  %v675 = vpop.f32.mrb[0].mxu0
  %v676 = vpop.f32.mrb[0].mxu0
  %677 = vdwg.mxu0
  %678 = vmatprep.subr.bf16.mxu0 0
  %679 = vmatpush1.bf16.msra.mxu0 %v590
  %680 = vmatprep.subr.bf16.mxu0 0
  %681 = vmatpush1.bf16.msra.mxu0 %v591
  %682 = vmatprep.subr.bf16.mxu0 0
  %683 = vmatpush1.bf16.msra.mxu0 %v592
  %684 = vmatprep.subr.bf16.mxu0 0
  %685 = vmatpush1.bf16.msra.mxu0 %v593
  %686 = vmatprep.subr.bf16.mxu0 0
  %687 = vmatpush1.bf16.msra.mxu0 %v594
  %688 = vmatprep.subr.bf16.mxu0 0
  %689 = vmatpush1.bf16.msra.mxu0 %v595
  %690 = vmatprep.subr.bf16.mxu0 0
  %691 = vmatpush1.bf16.msra.mxu0 %v596
  %692 = vmatprep.subr.bf16.mxu0 0
  %693 = vmatpush1.bf16.msra.mxu0 %v597
  %694 = vmatprep.subr.bf16.mxu0 0
  %695 = vmatpush1.bf16.msra.mxu0 %v598
  %696 = vmatprep.subr.bf16.mxu0 0
  %697 = vmatpush1.bf16.msra.mxu0 %v599
  %698 = vmatprep.subr.bf16.mxu0 0
  %699 = vmatpush1.bf16.msra.mxu0 %v600
  %700 = vmatprep.subr.bf16.mxu0 0
  %701 = vmatpush1.bf16.msra.mxu0 %v601
  %702 = vmatprep.subr.bf16.mxu0 0
  %703 = vmatpush1.bf16.msra.mxu0 %v602
  %704 = vmatprep.subr.bf16.mxu0 0
  %705 = vmatpush1.bf16.msra.mxu0 %v603
  %706 = vmatprep.subr.bf16.mxu0 0
  %707 = vmatpush1.bf16.msra.mxu0 %v604
  %708 = vmatprep.subr.bf16.mxu0 0
  %709 = vmatpush1.bf16.msra.mxu0 %v605
  %710 = vmatprep.mubr.bf16.mxu0 %v45
  %711 = vmatmul.mubr.bf16.gmra.mrb[0].mxu0 %v38
  %v712 = vpop.f32.mrb[0].mxu0
  %v713 = vadd.f32 %v673, %v712
  %v714 = vpop.f32.mrb[0].mxu0
  %v715 = vpop.f32.mrb[0].mxu0
  %v716 = vpop.f32.mrb[0].mxu0
  %717 = vdwg.mxu0
  %718 = vst [vmem:[%s3] sm:$0xff] %v713
  // Predicated region
  $region14: #{tox_bond_encoder.1} parent=0 // pred_check
    _
  $region15: #{tox_bond_encoder.1} parent=0 // pred_check_branch
    %720 = sbr.rel (0) target = $region17
  $region16: #{tox_bond_encoder.1} parent=0 // pred_region
    _
  $region17: #{tox_bond_encoder.1} parent=0 // pred_fallthru
    _
  // Predicated region
  $region18: #{tox_bond_encoder.1} parent=0 // pred_check
    _
  $region19: #{tox_bond_encoder.1} parent=0 // pred_check_branch
    %722 = sbr.rel (0) target = $region21
  $region20: #{tox_bond_encoder.1} parent=0 // pred_region
    _
  $region21: #{tox_bond_encoder.1} parent=0 // pred_fallthru
    _

</llo_original>
